<compile_context>
chip_gen: v5e
topology: v5e:2x2
jax: 0.10.0
libtpu: 0.0.40
codegen_flags: <defaults>
</compile_context>

<pallas_src>
import functools

import jax
import jax.numpy as jnp
from jax import lax
from jax.experimental import pallas as pl
from jax.experimental.pallas import tpu as pltpu

LANES = 128
ACC_ROWS = 32                    # accumulator depth -> 4 vregs per accumulator
NUM_SHARDS = 2                   # leading "parallel" grid axis (v7x: 2 TCs)
TARGET_BLOCK_ROWS = 4096         # (4096, 128) f32 = 2 MiB / input / pipeline buffer
VMEM_LIMIT_BYTES = 48 * 1024 * 1024
# TODO(synk): per-generation tile sizing (8192 rows on v6e/v7x) via
# pltpu.get_tpu_info(); 4096 is a safe default for all three generations.


def _esr_kernel(p_ref, t_ref, err_ref, eng_ref, *,
                valid_rows, block_rows, steps_per_shard):
    c = pl.program_id(0)               # shard (TensorCore) index
    i = pl.program_id(1)               # reduction step within the shard

    @pl.when(i == 0)
    def _():
        err_ref[...] = jnp.zeros_like(err_ref)
        eng_ref[...] = jnp.zeros_like(eng_ref)

    p = p_ref[...].astype(jnp.float32)
    t = t_ref[...].astype(jnp.float32)

    # Rows of this (clamped) block holding real data. Overflow steps of the
    # last shard land on the final block with n_ok <= 0 and contribute zero.
    blk = c * steps_per_shard + i
    n_ok = valid_rows - blk * block_rows

    @pl.when(n_ok >= block_rows)
    def _():
        # Steady state: full block, no masking work on the VPU.
        d = p - t
        err_ref[...] += jnp.sum((d * d).reshape(-1, ACC_ROWS, LANES), axis=0)
        eng_ref[...] += jnp.sum((t * t).reshape(-1, ACC_ROWS, LANES), axis=0)

    @pl.when(n_ok < block_rows)
    def _():
        # Ragged / overflow block: out-of-range rows hold unspecified data and
        # must be zeroed before accumulation.
        row_id = lax.broadcasted_iota(jnp.int32, (block_rows, 1), 0)
        mask = row_id < n_ok
        d = jnp.where(mask, p - t, 0.0)
        y = jnp.where(mask, t, 0.0)
        err_ref[...] += jnp.sum((d * d).reshape(-1, ACC_ROWS, LANES), axis=0)
        eng_ref[...] += jnp.sum((y * y).reshape(-1, ACC_ROWS, LANES), axis=0)


def esr_loss(predict: jax.Array, target: jax.Array,
             epsilon: float = 1e-12,
             block_rows: int = TARGET_BLOCK_ROWS) -> jax.Array:
    """Error-to-Signal Ratio loss == pyneuralfx ESRLoss(pre_emp=False)."""
    assert predict.shape == target.shape, "predict/target shape mismatch"
    n = predict.size

    p_flat = predict.reshape(-1)
    t_flat = target.reshape(-1)

    rows = n // LANES
    if rows < ACC_ROWS:            # too small for the kernel; plain-JAX path
        rows = 0
    n_main = rows * LANES

    err = jnp.zeros((), jnp.float32)
    eng = jnp.zeros((), jnp.float32)

    if rows > 0:
        br = min(block_rows, rows)
        br = max(ACC_ROWS, (br // ACC_ROWS) * ACC_ROWS)   # multiple of 32

        # Zero-copy reshape when n % 128 == 0; otherwise XLA slices the prefix.
        # TODO(synk): fully copy-free ragged path via a 1-D pl.ANY input +
        # manual DMA if the prefix slice ever shows up in profiles.
        p_main = p_flat[:n_main].reshape(rows, LANES)
        t_main = t_flat[:n_main].reshape(rows, LANES)

        num_blocks = pl.cdiv(rows, br)
        steps_per_shard = pl.cdiv(num_blocks, NUM_SHARDS)
        grid = (NUM_SHARDS, steps_per_shard)

        def in_map(c, i):
            # Clamp overflow steps of the last shard onto the final block; the
            # kernel masks their contribution to zero.
            return (jnp.minimum(c * steps_per_shard + i, num_blocks - 1), 0)

        def out_map(c, i):
            return (c, 0, 0)

        kernel = functools.partial(_esr_kernel, valid_rows=rows, block_rows=br,
                                   steps_per_shard=steps_per_shard)

        itemsize = jnp.dtype(predict.dtype).itemsize
        cost = pl.CostEstimate(
            flops=5 * n_main,
            transcendentals=0,
            bytes_accessed=2 * n_main * itemsize
            + 2 * NUM_SHARDS * ACC_ROWS * LANES * 4,
        )

        err_p, eng_p = pl.pallas_call(
            kernel,
            out_shape=(
                jax.ShapeDtypeStruct((NUM_SHARDS, ACC_ROWS, LANES), jnp.float32),
                jax.ShapeDtypeStruct((NUM_SHARDS, ACC_ROWS, LANES), jnp.float32),
            ),
            grid_spec=pltpu.PrefetchScalarGridSpec(
                num_scalar_prefetch=0,
                grid=grid,
                in_specs=[
                    pl.BlockSpec((br, LANES), in_map),
                    pl.BlockSpec((br, LANES), in_map),
                ],
                out_specs=[
                    pl.BlockSpec((None, ACC_ROWS, LANES), out_map),
                    pl.BlockSpec((None, ACC_ROWS, LANES), out_map),
                ],
            ),
            compiler_params=pltpu.CompilerParams(
                dimension_semantics=("parallel", "arbitrary"),
                vmem_limit_bytes=VMEM_LIMIT_BYTES,
            ),
            cost_estimate=cost,
        )(p_main, t_main)

        err = err + jnp.sum(err_p)
        eng = eng + jnp.sum(eng_p)

    if n_main < n:
        # Tiny ragged tail (< 128 elements, or the whole signal when n < 4096).
        p_tail = p_flat[n_main:].astype(jnp.float32)
        t_tail = t_flat[n_main:].astype(jnp.float32)
        err = err + jnp.sum((t_tail - p_tail) ** 2)
        eng = eng + jnp.sum(t_tail ** 2)

    inv_n = jnp.float32(1.0 / n)
    return (err * inv_n) / (eng * inv_n + jnp.float32(epsilon))


# TODO(synk): DC_PreEmph pre-emphasis filter (pre_emp=True constructor path)
# not implemented; default ESRLoss(pre_emp=False) semantics are reproduced.


if __name__ == "__main__":
    key = jax.random.PRNGKey(0)
    kp, kt = jax.random.split(key)

    def ref_loss(p, t, eps=1e-12):
        p32 = p.astype(jnp.float32)
        t32 = t.astype(jnp.float32)
        return jnp.mean((t32 - p32) ** 2) / (jnp.mean(t32 ** 2) + eps)

    esr = jax.jit(esr_loss, static_argnames=("epsilon", "block_rows"))

    # 1) Aligned fast path (n % 128 == 0): grid (2, 1), full + overflow blocks.
    B, C, T = 2, 1, 16384
    p1 = jax.random.normal(kp, (B, C, T), jnp.float32)
    t1 = jax.random.normal(kt, (B, C, T), jnp.float32)
    l1 = jax.block_until_ready(esr(p1, t1))
    r1 = ref_loss(p1, t1)
    assert jnp.allclose(l1, r1, rtol=1e-4, atol=1e-6), (l1, r1)

    # 2) Ragged size (n % 128 != 0): masked partial block + plain-JAX tail.
    p2 = jax.random.normal(kp, (2, 1, 5000), jnp.float32)
    t2 = jax.random.normal(kt, (2, 1, 5000), jnp.float32)
    l2 = jax.block_until_ready(esr(p2, t2))
    r2 = ref_loss(p2, t2)
    assert jnp.allclose(l2, r2, rtol=1e-4, atol=1e-6), (l2, r2)

    # 3) Multi-step accumulation per shard (small tile forces grid (2, 7)).
    p3 = jax.random.normal(kp, (2, 1, 50000), jnp.float32)
    t3 = jax.random.normal(kt, (2, 1, 50000), jnp.float32)
    l3 = jax.block_until_ready(esr(p3, t3, block_rows=64))
    r3 = ref_loss(p3, t3)
    assert jnp.allclose(l3, r3, rtol=1e-4, atol=1e-6), (l3, r3)

    # 4) bf16 inputs (half the HBM bytes); accumulation stays f32 in-kernel.
    p4 = p1.astype(jnp.bfloat16)
    t4 = t1.astype(jnp.bfloat16)
    l4 = jax.block_until_ready(esr(p4, t4))
    r4 = ref_loss(p4, t4)
    assert jnp.allclose(l4, r4, rtol=1e-3, atol=1e-5), (l4, r4)

    print("KERNEL_OK")
</pallas_src>

<mosaic_0001>
module attributes {stable_mosaic.version = 11 : i64} {
  func.func @_esr_kernel(%arg0: i32, %arg1: i32, %arg2: memref<256x128xf32, #tpu.memory_space<vmem>>, %arg3: memref<256x128xf32, #tpu.memory_space<vmem>>, %arg4: memref<1x32x128xf32, #tpu.memory_space<vmem>>, %arg5: memref<1x32x128xf32, #tpu.memory_space<vmem>>) attributes {dimension_semantics = [#tpu.dimension_semantics<parallel>, #tpu.dimension_semantics<arbitrary>], iteration_bounds = array<i64: 2, 1>, scalar_prefetch = 0 : i64, scratch_operands = 0 : i64, tpu.core_type = #tpu.core_type<tc>, window_params = [{transform_indices = @transform_0, window_bounds = array<i64: 256, 128>}, {transform_indices = @transform_1, window_bounds = array<i64: 256, 128>}, {transform_indices = @transform_2, window_bounds = array<i64: 1, 32, 128>}, {transform_indices = @transform_3, window_bounds = array<i64: 1, 32, 128>}]} {
    %c0_i32 = arith.constant 0 : i32
    %0 = arith.cmpi eq, %arg1, %c0_i32 : i32
    %1 = arith.extui %0 : i1 to i32
    %c0_i32_0 = arith.constant 0 : i32
    %2 = arith.cmpi ne, %1, %c0_i32_0 : i32
    scf.if %2 {
      %cst = arith.constant 0.000000e+00 : f32
      %15 = vector.broadcast %cst : f32 to vector<32x128xf32>
      %c0_9 = arith.constant 0 : index
      %c0_10 = arith.constant 0 : index
      %c0_11 = arith.constant 0 : index
      %16 = vector.load %arg4[%c0_9, %c0_10, %c0_11] : memref<1x32x128xf32, #tpu.memory_space<vmem>>, vector<1x32x128xf32>
      %17 = vector.shape_cast %16 : vector<1x32x128xf32> to vector<32x128xf32>
      %18 = vector.shape_cast %15 : vector<32x128xf32> to vector<1x32x128xf32>
      tpu.vector_store %arg4[%c0_9, %c0_10, %c0_11], %18 {strides = array<i32>} : memref<1x32x128xf32, #tpu.memory_space<vmem>>, vector<1x32x128xf32>,
      %cst_12 = arith.constant 0.000000e+00 : f32
      %19 = vector.broadcast %cst_12 : f32 to vector<32x128xf32>
      %c0_13 = arith.constant 0 : index
      %c0_14 = arith.constant 0 : index
      %c0_15 = arith.constant 0 : index
      %20 = vector.load %arg5[%c0_13, %c0_14, %c0_15] : memref<1x32x128xf32, #tpu.memory_space<vmem>>, vector<1x32x128xf32>
      %21 = vector.shape_cast %20 : vector<1x32x128xf32> to vector<32x128xf32>
      %22 = vector.shape_cast %19 : vector<32x128xf32> to vector<1x32x128xf32>
      tpu.vector_store %arg5[%c0_13, %c0_14, %c0_15], %22 {strides = array<i32>} : memref<1x32x128xf32, #tpu.memory_space<vmem>>, vector<1x32x128xf32>,
    } else {
    }
    %c0 = arith.constant 0 : index
    %c0_1 = arith.constant 0 : index
    %3 = vector.load %arg2[%c0, %c0_1] : memref<256x128xf32, #tpu.memory_space<vmem>>, vector<256x128xf32>
    %c0_2 = arith.constant 0 : index
    %c0_3 = arith.constant 0 : index
    %4 = vector.load %arg3[%c0_2, %c0_3] : memref<256x128xf32, #tpu.memory_space<vmem>>, vector<256x128xf32>
    %c1_i32 = arith.constant 1 : i32
    %5 = arith.muli %arg0, %c1_i32 : i32
    %6 = arith.addi %5, %arg1 : i32
    %c256_i32 = arith.constant 256 : i32
    %7 = arith.muli %6, %c256_i32 : i32
    %c256_i32_4 = arith.constant 256 : i32
    %8 = arith.subi %c256_i32_4, %7 : i32
    %c256_i32_5 = arith.constant 256 : i32
    %9 = arith.cmpi sge, %8, %c256_i32_5 : i32
    %10 = arith.extui %9 : i1 to i32
    %c0_i32_6 = arith.constant 0 : i32
    %11 = arith.cmpi ne, %10, %c0_i32_6 : i32
    scf.if %11 {
      %15 = arith.subf %3, %4 : vector<256x128xf32>
      %c0_9 = arith.constant 0 : index
      %c0_10 = arith.constant 0 : index
      %c0_11 = arith.constant 0 : index
      %16 = vector.load %arg4[%c0_9, %c0_10, %c0_11] : memref<1x32x128xf32, #tpu.memory_space<vmem>>, vector<1x32x128xf32>
      %17 = vector.shape_cast %16 : vector<1x32x128xf32> to vector<32x128xf32>
      %18 = arith.mulf %15, %15 : vector<256x128xf32>
      %19 = vector.shape_cast %18 : vector<256x128xf32> to vector<8x32x128xf32>
      %cst = arith.constant dense<0.000000e+00> : vector<32x128xf32>
      %20 = vector.multi_reduction <add>, %19, %cst [0] : vector<8x32x128xf32> to vector<32x128xf32>
      %21 = arith.addf %17, %20 : vector<32x128xf32>
      %c0_12 = arith.constant 0 : index
      %c0_13 = arith.constant 0 : index
      %c0_14 = arith.constant 0 : index
      %22 = vector.load %arg4[%c0_12, %c0_13, %c0_14] : memref<1x32x128xf32, #tpu.memory_space<vmem>>, vector<1x32x128xf32>
      %23 = vector.shape_cast %22 : vector<1x32x128xf32> to vector<32x128xf32>
      %24 = vector.shape_cast %21 : vector<32x128xf32> to vector<1x32x128xf32>
      tpu.vector_store %arg4[%c0_12, %c0_13, %c0_14], %24 {strides = array<i32>} : memref<1x32x128xf32, #tpu.memory_space<vmem>>, vector<1x32x128xf32>,
      %c0_15 = arith.constant 0 : index
      %c0_16 = arith.constant 0 : index
      %c0_17 = arith.constant 0 : index
      %25 = vector.load %arg5[%c0_15, %c0_16, %c0_17] : memref<1x32x128xf32, #tpu.memory_space<vmem>>, vector<1x32x128xf32>
      %26 = vector.shape_cast %25 : vector<1x32x128xf32> to vector<32x128xf32>
      %27 = arith.mulf %4, %4 : vector<256x128xf32>
      %28 = vector.shape_cast %27 : vector<256x128xf32> to vector<8x32x128xf32>
      %cst_18 = arith.constant dense<0.000000e+00> : vector<32x128xf32>
      %29 = vector.multi_reduction <add>, %28, %cst_18 [0] : vector<8x32x128xf32> to vector<32x128xf32>
      %30 = arith.addf %26, %29 : vector<32x128xf32>
      %c0_19 = arith.constant 0 : index
      %c0_20 = arith.constant 0 : index
      %c0_21 = arith.constant 0 : index
      %31 = vector.load %arg5[%c0_19, %c0_20, %c0_21] : memref<1x32x128xf32, #tpu.memory_space<vmem>>, vector<1x32x128xf32>
      %32 = vector.shape_cast %31 : vector<1x32x128xf32> to vector<32x128xf32>
      %33 = vector.shape_cast %30 : vector<32x128xf32> to vector<1x32x128xf32>
      tpu.vector_store %arg5[%c0_19, %c0_20, %c0_21], %33 {strides = array<i32>} : memref<1x32x128xf32, #tpu.memory_space<vmem>>, vector<1x32x128xf32>,
    } else {
    }
    %c256_i32_7 = arith.constant 256 : i32
    %12 = arith.cmpi slt, %8, %c256_i32_7 : i32
    %13 = arith.extui %12 : i1 to i32
    %c0_i32_8 = arith.constant 0 : i32
    %14 = arith.cmpi ne, %13, %c0_i32_8 : i32
    scf.if %14 {
      %15 = tpu.iota {dimensions = array<i32: 0>} : vector<256x1xi32>
      %16 = vector.broadcast %8 : i32 to vector<256x1xi32>
      %17 = arith.cmpi slt, %15, %16 : vector<256x1xi32>
      %18 = arith.subf %3, %4 : vector<256x128xf32>
      %cst = arith.constant 0.000000e+00 : f32
      %19 = vector.shape_cast %17 : vector<256x1xi1> to vector<256x1xi1>
      %20 = vector.broadcast %19 : vector<256x1xi1> to vector<256x128xi1>
      %21 = vector.broadcast %cst : f32 to vector<256x128xf32>
      %22 = arith.select %20, %18, %21 : vector<256x128xi1>, vector<256x128xf32>
      %cst_9 = arith.constant 0.000000e+00 : f32
      %23 = vector.shape_cast %17 : vector<256x1xi1> to vector<256x1xi1>
      %24 = vector.broadcast %23 : vector<256x1xi1> to vector<256x128xi1>
      %25 = vector.broadcast %cst_9 : f32 to vector<256x128xf32>
      %26 = arith.select %24, %4, %25 : vector<256x128xi1>, vector<256x128xf32>
      %c0_10 = arith.constant 0 : index
      %c0_11 = arith.constant 0 : index
      %c0_12 = arith.constant 0 : index
      %27 = vector.load %arg4[%c0_10, %c0_11, %c0_12] : memref<1x32x128xf32, #tpu.memory_space<vmem>>, vector<1x32x128xf32>
      %28 = vector.shape_cast %27 : vector<1x32x128xf32> to vector<32x128xf32>
      %29 = arith.mulf %22, %22 : vector<256x128xf32>
      %30 = vector.shape_cast %29 : vector<256x128xf32> to vector<8x32x128xf32>
      %cst_13 = arith.constant dense<0.000000e+00> : vector<32x128xf32>
      %31 = vector.multi_reduction <add>, %30, %cst_13 [0] : vector<8x32x128xf32> to vector<32x128xf32>
      %32 = arith.addf %28, %31 : vector<32x128xf32>
      %c0_14 = arith.constant 0 : index
      %c0_15 = arith.constant 0 : index
      %c0_16 = arith.constant 0 : index
      %33 = vector.load %arg4[%c0_14, %c0_15, %c0_16] : memref<1x32x128xf32, #tpu.memory_space<vmem>>, vector<1x32x128xf32>
      %34 = vector.shape_cast %33 : vector<1x32x128xf32> to vector<32x128xf32>
      %35 = vector.shape_cast %32 : vector<32x128xf32> to vector<1x32x128xf32>
      tpu.vector_store %arg4[%c0_14, %c0_15, %c0_16], %35 {strides = array<i32>} : memref<1x32x128xf32, #tpu.memory_space<vmem>>, vector<1x32x128xf32>,
      %c0_17 = arith.constant 0 : index
      %c0_18 = arith.constant 0 : index
      %c0_19 = arith.constant 0 : index
      %36 = vector.load %arg5[%c0_17, %c0_18, %c0_19] : memref<1x32x128xf32, #tpu.memory_space<vmem>>, vector<1x32x128xf32>
      %37 = vector.shape_cast %36 : vector<1x32x128xf32> to vector<32x128xf32>
      %38 = arith.mulf %26, %26 : vector<256x128xf32>
      %39 = vector.shape_cast %38 : vector<256x128xf32> to vector<8x32x128xf32>
      %cst_20 = arith.constant dense<0.000000e+00> : vector<32x128xf32>
      %40 = vector.multi_reduction <add>, %39, %cst_20 [0] : vector<8x32x128xf32> to vector<32x128xf32>
      %41 = arith.addf %37, %40 : vector<32x128xf32>
      %c0_21 = arith.constant 0 : index
      %c0_22 = arith.constant 0 : index
      %c0_23 = arith.constant 0 : index
      %42 = vector.load %arg5[%c0_21, %c0_22, %c0_23] : memref<1x32x128xf32, #tpu.memory_space<vmem>>, vector<1x32x128xf32>
      %43 = vector.shape_cast %42 : vector<1x32x128xf32> to vector<32x128xf32>
      %44 = vector.shape_cast %41 : vector<32x128xf32> to vector<1x32x128xf32>
      tpu.vector_store %arg5[%c0_21, %c0_22, %c0_23], %44 {strides = array<i32>} : memref<1x32x128xf32, #tpu.memory_space<vmem>>, vector<1x32x128xf32>,
    } else {
    }
    return
  }
  func.func @transform_0(%arg0: i32, %arg1: i32) -> (i32, i32) {
    %c1_i32 = arith.constant 1 : i32
    %0 = arith.muli %arg0, %c1_i32 : i32
    %1 = arith.addi %0, %arg1 : i32
    %c0_i32 = arith.constant 0 : i32
    %2 = arith.minsi %1, %c0_i32 : i32
    %c0_i32_0 = arith.constant 0 : i32
    %c0_i32_1 = arith.constant 0 : i32
    return %2, %c0_i32_0 : i32, i32
  }
  func.func @transform_1(%arg0: i32, %arg1: i32) -> (i32, i32) {
    %c1_i32 = arith.constant 1 : i32
    %0 = arith.muli %arg0, %c1_i32 : i32
    %1 = arith.addi %0, %arg1 : i32
    %c0_i32 = arith.constant 0 : i32
    %2 = arith.minsi %1, %c0_i32 : i32
    %c0_i32_0 = arith.constant 0 : i32
    %c0_i32_1 = arith.constant 0 : i32
    return %2, %c0_i32_0 : i32, i32
  }
  func.func @transform_2(%arg0: i32, %arg1: i32) -> (i32, i32, i32) {
    %c0_i32 = arith.constant 0 : i32
    %c0_i32_0 = arith.constant 0 : i32
    %c0_i32_1 = arith.constant 0 : i32
    return %arg0, %c0_i32, %c0_i32_0 : i32, i32, i32
  }
  func.func @transform_3(%arg0: i32, %arg1: i32) -> (i32, i32, i32) {
    %c0_i32 = arith.constant 0 : i32
    %c0_i32_0 = arith.constant 0 : i32
    %c0_i32_1 = arith.constant 0 : i32
    return %arg0, %c0_i32, %c0_i32_0 : i32, i32, i32
  }
}

</mosaic_0001>

<llo_original>
// kernel: esr_loss.1
$region0: #{esr_loss.1}
  #allocation0 [shape = 'u32[]', space=smem, size = 0x4, offset = 0x4, fixed_abs, tag = 'smem constant byte address 0x4 - core index']
  #allocation1 [shape = 'u32[72,128]{1,0:T(1,128)}', space=vmem, size = 0x9000, scoped, tag = 'internal scratch']
  %s0 = inlined_call_operand.hbm [shape: f32[256,128], index: 0, kind: input, shape index: {}]
  %s1 = inlined_call_operand.hbm [shape: f32[256,128], index: 1, kind: input, shape index: {}]
  %s2 = inlined_call_operand.vmem [shape: f32[2,32,128], index: 2, kind: output, shape index: {0}]
  %s3 = inlined_call_operand.vmem [shape: f32[2,32,128], index: 3, kind: output, shape index: {1}]
  %4 = xla_tuple %s2, %s3
  %s5 = sld [smem:[#allocation0]]
  $region69: #{esr_loss.1} parent=0
    _
  %s7 = ssub.s32 1, %s5
  %s8 = scalar_select 0, %s7, %s5
  $region1: #{esr_loss.1} parent=0
    #allocation2 [shape = 'u8[262144]{0}', space=vmem, size = 0x40000, scoped, tag = 'input window, operand 0']
    #allocation3 [shape = 's32[2]{0}', space=sflag, size = 0x8, scoped, tag = 'scoped memory for esr_loss.1']
    #allocation4 [shape = 'u8[262144]{0}', space=vmem, size = 0x40000, scoped, tag = 'input window, operand 1']
    #allocation5 [shape = 's32[2]{0}', space=sflag, size = 0x8, scoped, tag = 'scoped memory for esr_loss.1']
    %9 = vsyncpa [#allocation3], 0
    %s10 = scalar_lea.sflag [#allocation3], 1
    %11 = vsyncpa %s10, 0
    %12 = vsyncpa [#allocation5], 0
    %s13 = scalar_lea.sflag [#allocation5], 1
    %14 = vsyncpa %s13, 0
    loop: start=0, step=1, limit=4
    $region2: #{esr_loss.1} parent=1 // loop_pre_header
      _
    $region3: #{esr_loss.1} parent=1 // loop_header
      %s16 = sphi 0, %s20
      %p17 = scmp.ge.s32.totalorder %s16, 4
      %s23 = sphi 0, %s35
      %s24 = sphi 0, %s31
      %s25 = sphi 0, %s23
      %s26 = sphi 0, %s24
      %s27 = sphi 0, %s25
      %s28 = sphi 0, %s26
      %s44 = sphi 0, %s46
      %s47 = sphi 0, %s44
      %s48 = sphi 0, %s47
      %s64 = sphi 0, %s48
      %s76 = sphi 0, %s78
      %s79 = sphi 0, %s76
      %s80 = sphi 0, %s79
      %s96 = sphi 0, %s80
      %s102 = sphi 0, %s104
      %s105 = sphi 0, %s102
      %s106 = sphi 0, %s105
      %s122 = sphi 0, %s106
      %s128 = sphi 0, %s130
      %s131 = sphi 0, %s128
      %s132 = sphi 0, %s131
      %s148 = sphi 0, %s132
    $region4: #{esr_loss.1} parent=1 // loop_header_branch
      %19 = sbr.rel (%p17) target = $region8
    $region5: #{esr_loss.1} parent=1 // loop_body
      %s21 = ssub.s32 %s16, 1
      %s22 = ssub.s32 %s16, 2
      %s29 = sadd.s32 1, %s24
      %p30 = scmp.ge.s32.totalorder %s29, 1
      %s31 = scalar_select %p30, 0, %s29
      %s32 = sadd.s32 1, %s23
      %s33 = scalar_select %p30, %s32, %s23
      %p34 = scmp.ge.s32.totalorder %s33, 2
      %s35 = scalar_select %p34, 0, %s33
      %s36 = sadd.s32 %s23, %s24
      %p37 = scmp.lt.s32.totalorder %s36, 0
      %s38 = scalar_select %p37, %s36, 0
      %s39 = sadd.s32 %s35, %s31
      %p40 = scmp.lt.s32.totalorder %s39, 0
      %s41 = scalar_select %p40, %s39, 0
      %s42 = ssub.s32 %s38, %s41
      %p43 = scmp.eq.s32.totalorder %s42, 0
      %s45 = sadd.s32 %s44, 1
      %s46 = scalar_select %p43, %s44, %s45
      %p49 = pneg %p43
      %p50 = scmp.eq.s32.totalorder %s16, 1
      %p51 = por %p49, %p50
      %p52 = scmp.ne.s32.totalorder %s44, %s47
      %p53 = scmp.eq.s32.totalorder %s16, 0
      %p54 = por %p52, %p53
      %p55 = scmp.ne.s32.totalorder %s44, %s47
      %p56 = scmp.eq.s32.totalorder %s21, 1
      %p57 = por %p55, %p56
      %p58 = scmp.ne.s32.totalorder %s47, %s48
      %p59 = scmp.eq.s32.totalorder %s21, 0
      %p60 = por %p58, %p59
      %p61 = scmp.ne.s32.totalorder %s47, %s48
      %p62 = scmp.eq.s32.totalorder %s22, 1
      %p63 = por %p61, %p62
      %p65 = scmp.ne.s32.totalorder %s48, %s64
      %p66 = scmp.eq.s32.totalorder %s22, 0
      %p67 = por %p65, %p66
      %s68 = sadd.s32 %s23, %s24
      %p69 = scmp.lt.s32.totalorder %s68, 0
      %s70 = scalar_select %p69, %s68, 0
      %s71 = sadd.s32 %s35, %s31
      %p72 = scmp.lt.s32.totalorder %s71, 0
      %s73 = scalar_select %p72, %s71, 0
      %s74 = ssub.s32 %s70, %s73
      %p75 = scmp.eq.s32.totalorder %s74, 0
      %s77 = sadd.s32 %s76, 1
      %s78 = scalar_select %p75, %s76, %s77
      %p81 = pneg %p75
      %p82 = scmp.eq.s32.totalorder %s16, 1
      %p83 = por %p81, %p82
      %p84 = scmp.ne.s32.totalorder %s76, %s79
      %p85 = scmp.eq.s32.totalorder %s16, 0
      %p86 = por %p84, %p85
      %p87 = scmp.ne.s32.totalorder %s76, %s79
      %p88 = scmp.eq.s32.totalorder %s21, 1
      %p89 = por %p87, %p88
      %p90 = scmp.ne.s32.totalorder %s79, %s80
      %p91 = scmp.eq.s32.totalorder %s21, 0
      %p92 = por %p90, %p91
      %p93 = scmp.ne.s32.totalorder %s79, %s80
      %p94 = scmp.eq.s32.totalorder %s22, 1
      %p95 = por %p93, %p94
      %p97 = scmp.ne.s32.totalorder %s80, %s96
      %p98 = scmp.eq.s32.totalorder %s22, 0
      %p99 = por %p97, %p98
      %s100 = ssub.s32 %s23, %s35
      %p101 = scmp.eq.s32.totalorder %s100, 0
      %s103 = sadd.s32 %s102, 1
      %s104 = scalar_select %p101, %s102, %s103
      %p107 = pneg %p101
      %p108 = scmp.eq.s32.totalorder %s16, 1
      %p109 = por %p107, %p108
      %p110 = scmp.ne.s32.totalorder %s102, %s105
      %p111 = scmp.eq.s32.totalorder %s16, 0
      %p112 = por %p110, %p111
      %p113 = scmp.ne.s32.totalorder %s102, %s105
      %p114 = scmp.eq.s32.totalorder %s21, 1
      %p115 = por %p113, %p114
      %p116 = scmp.ne.s32.totalorder %s105, %s106
      %p117 = scmp.eq.s32.totalorder %s21, 0
      %p118 = por %p116, %p117
      %p119 = scmp.ne.s32.totalorder %s105, %s106
      %p120 = scmp.eq.s32.totalorder %s22, 1
      %p121 = por %p119, %p120
      %p123 = scmp.ne.s32.totalorder %s106, %s122
      %p124 = scmp.eq.s32.totalorder %s22, 0
      %p125 = por %p123, %p124
      %s126 = ssub.s32 %s23, %s35
      %p127 = scmp.eq.s32.totalorder %s126, 0
      %s129 = sadd.s32 %s128, 1
      %s130 = scalar_select %p127, %s128, %s129
      %p133 = pneg %p127
      %p134 = scmp.eq.s32.totalorder %s16, 1
      %p135 = por %p133, %p134
      %p136 = scmp.ne.s32.totalorder %s128, %s131
      %p137 = scmp.eq.s32.totalorder %s16, 0
      %p138 = por %p136, %p137
      %p139 = scmp.ne.s32.totalorder %s128, %s131
      %p140 = scmp.eq.s32.totalorder %s21, 1
      %p141 = por %p139, %p140
      %p142 = scmp.ne.s32.totalorder %s131, %s132
      %p143 = scmp.eq.s32.totalorder %s21, 0
      %p144 = por %p142, %p143
      %p145 = scmp.ne.s32.totalorder %s131, %s132
      %p146 = scmp.eq.s32.totalorder %s22, 1
      %p147 = por %p145, %p146
      %p149 = scmp.ne.s32.totalorder %s132, %s148
      %p150 = scmp.eq.s32.totalorder %s22, 0
      %p151 = por %p149, %p150
      %p152 = scmp.le.s32.totalorder 1, %s16
      %p153 = scmp.lt.s32.totalorder %s16, 3
      %p154 = pnand %p152, %p153
      %p155 = pneg %p154
      // Predicated region
      $region9: #{esr_loss.1} parent=5 // pred_check
        _
      $region10: #{esr_loss.1} parent=5 // pred_check_branch
        %157 = sbr.rel (%p154) target = $region12
      $region11: #{esr_loss.1} parent=5 // pred_region
        %s158 = ssub.s32 %s16, 1
      $region12: #{esr_loss.1} parent=5 // pred_fallthru
        _
      %p159 = scmp.lt.s32.totalorder %s16, 2
      // Predicated region
      $region13: #{esr_loss.1} parent=5 // pred_check
        %p160 = pneg %p159
      $region14: #{esr_loss.1} parent=5 // pred_check_branch
        %162 = sbr.rel (%p160) target = $region16
      $region15: #{esr_loss.1} parent=5 // pred_region
        // Predicated region
        $region17: #{esr_loss.1} parent=15 // pred_check
          %p163 = pneg %p54
        $region18: #{esr_loss.1} parent=15 // pred_check_branch
          %165 = sbr.rel (%p163) target = $region20
        $region19: #{esr_loss.1} parent=15 // pred_region
          %s166 = sand.u32 %s44, 1
          %s167 = scalar_lea.sflag [#allocation3], %s166
          %s168 = sand.u32 %s44, 1
          %s169 = smul.addr %s168, 256
          %s170 = scalar_lea.vmem [#allocation2], %s169
          %s171 = sadd.s32 %s23, %s24
          %p172 = scmp.lt.s32.totalorder %s171, 0
          %s173 = scalar_select %p172, %s171, 0
          %s174 = smul.u32 32, %s173
          %176 = vsyncadd %s167, 0
          %s177 = smul.addr %s174, 8
          %s178 = scalar_lea.hbm %s0, %s177
          %s179 = sshll.u32 %s178, 4
          %s180 = int_to_ptr.hbm [resolvable:$true] %s179
          %s181 = sshll.u32 %s170, 4
          %s182 = int_to_ptr.vmem [resolvable:$true] %s181
          %187 = dma.hbm_to_vmem [thread:$0]  %s180, 4096, %s182, %s167, 128, 128, 8
        $region20: #{esr_loss.1} parent=15 // pred_fallthru
          _
        // Predicated region
        $region21: #{esr_loss.1} parent=15 // pred_check
          %p188 = pneg %p86
        $region22: #{esr_loss.1} parent=15 // pred_check_branch
          %190 = sbr.rel (%p188) target = $region24
        $region23: #{esr_loss.1} parent=15 // pred_region
          %s191 = sand.u32 %s76, 1
          %s192 = scalar_lea.sflag [#allocation5], %s191
          %s193 = sand.u32 %s76, 1
          %s194 = smul.addr %s193, 256
          %s195 = scalar_lea.vmem [#allocation4], %s194
          %s196 = sadd.s32 %s23, %s24
          %p197 = scmp.lt.s32.totalorder %s196, 0
          %s198 = scalar_select %p197, %s196, 0
          %s199 = smul.u32 32, %s198
          %201 = vsyncadd %s192, 0
          %s202 = smul.addr %s199, 8
          %s203 = scalar_lea.hbm %s1, %s202
          %s204 = sshll.u32 %s203, 4
          %s205 = int_to_ptr.hbm [resolvable:$true] %s204
          %s206 = sshll.u32 %s195, 4
          %s207 = int_to_ptr.vmem [resolvable:$true] %s206
          %212 = dma.hbm_to_vmem [thread:$0]  %s205, 4096, %s207, %s192, 128, 128, 8
        $region24: #{esr_loss.1} parent=15 // pred_fallthru
          _
      $region16: #{esr_loss.1} parent=5 // pred_fallthru
        _
      %p213 = scmp.le.s32.totalorder 1, %s16
      %p214 = scmp.lt.s32.totalorder %s16, 3
      %p215 = pnand %p213, %p214
      %p216 = pneg %p215
      // Predicated region
      $region25: #{esr_loss.1} parent=5 // pred_check
        _
      $region26: #{esr_loss.1} parent=5 // pred_check_branch
        %218 = sbr.rel (%p215) target = $region28
      $region27: #{esr_loss.1} parent=5 // pred_region
        %s219 = ssub.s32 %s16, 1
        %s220 = sand.u32 %s47, 1
        %s221 = scalar_lea.sflag [#allocation3], %s220
        %s222 = sand.u32 %s47, 1
        %s223 = smul.addr %s222, 256
        %s224 = scalar_lea.vmem [#allocation2], %s223
        // Predicated region
        $region29: #{esr_loss.1} parent=27 // pred_check
          %p225 = pneg %p60
        $region30: #{esr_loss.1} parent=27 // pred_check_branch
          %227 = sbr.rel (%p225) target = $region32
        $region31: #{esr_loss.1} parent=27 // pred_region
          %229 = dma.done %s221, 4096
        $region32: #{esr_loss.1} parent=27 // pred_fallthru
          _
        %s230 = sand.u32 %s79, 1
        %s231 = scalar_lea.sflag [#allocation5], %s230
        %s232 = sand.u32 %s79, 1
        %s233 = smul.addr %s232, 256
        %s234 = scalar_lea.vmem [#allocation4], %s233
        // Predicated region
        $region33: #{esr_loss.1} parent=27 // pred_check
          %p235 = pneg %p92
        $region34: #{esr_loss.1} parent=27 // pred_check_branch
          %237 = sbr.rel (%p235) target = $region36
        $region35: #{esr_loss.1} parent=27 // pred_region
          %239 = dma.done %s231, 4096
        $region36: #{esr_loss.1} parent=27 // pred_fallthru
          _
        %s240 = sand.u32 %s47, 1
        %s241 = scalar_lea.sflag [#allocation3], %s240
        %s242 = sand.u32 %s47, 1
        %s243 = smul.addr %s242, 256
        %s244 = scalar_lea.vmem [#allocation2], %s243
        %p245 = pneg %p60
        %p246 = pneg %p57
        %s247 = sand.u32 %s79, 1
        %s248 = scalar_lea.sflag [#allocation5], %s247
        %s249 = sand.u32 %s79, 1
        %s250 = smul.addr %s249, 256
        %s251 = scalar_lea.vmem [#allocation4], %s250
        %p252 = pneg %p92
        %p253 = pneg %p89
        %p254 = pneg %p118
        %p255 = pneg %p115
        %p256 = scmp.lt.s32.totalorder %s25, 1
        %s257 = scalar_select %p256, %s25, 1
        %s258 = smul.addr %s257, 4
        %s259 = smul.addr %s258, 8
        %s260 = scalar_lea.vmem %s2, %s259
        %p261 = pneg %p144
        %p262 = pneg %p141
        %p263 = scmp.lt.s32.totalorder %s25, 1
        %s264 = scalar_select %p263, %s25, 1
        %s265 = smul.addr %s264, 4
        %s266 = smul.addr %s265, 8
        %s267 = scalar_lea.vmem %s3, %s266
        %s268 = sadd.s32 %s25, %s26
        %p269 = scmp.lt.s32.totalorder %s268, 0
        %s270 = scalar_select %p269, %s268, 0
        %s271 = smul.u32 32, %s270
        %s272 = sadd.s32 %s25, %s26
        %p273 = scmp.lt.s32.totalorder %s272, 0
        %s274 = scalar_select %p273, %s272, 0
        %s275 = smul.u32 32, %s274
        %p276 = scmp.lt.s32.totalorder %s25, 1
        %s277 = scalar_select %p276, %s25, 1
        %s278 = smul.addr %s277, 4
        %s279 = smul.addr %s278, 8
        %s280 = scalar_lea.vmem %s2, %s279
        %p281 = scmp.lt.s32.totalorder %s25, 1
        %s282 = scalar_select %p281, %s25, 1
        %s283 = smul.addr %s282, 4
        %s284 = smul.addr %s283, 8
        %s285 = scalar_lea.vmem %s3, %s284
        %p286 = scmp.eq.s32.totalorder %s26, 0
        // Predicated region
        $region37: #{esr_loss.1} parent=27 // pred_check
          %p287 = pneg %p286
        $region38: #{esr_loss.1} parent=27 // pred_check_branch
          %289 = sbr.rel (%p287) target = $region40
        $region39: #{esr_loss.1} parent=27 // pred_region
          %290 = vst [vmem:[%s280] sm:$0xff] 0.0
          %291 = vst [vmem:[%s280 + $0x8] sm:$0xff] 0.0
          %292 = vst [vmem:[%s280 + $0x10] sm:$0xff] 0.0
          %293 = vst [vmem:[%s280 + $0x18] sm:$0xff] 0.0
          %294 = vst [vmem:[%s285] sm:$0xff] 0.0
          %295 = vst [vmem:[%s285 + $0x8] sm:$0xff] 0.0
          %296 = vst [vmem:[%s285 + $0x10] sm:$0xff] 0.0
          %297 = vst [vmem:[%s285 + $0x18] sm:$0xff] 0.0
        $region40: #{esr_loss.1} parent=27 // pred_fallthru
          _
        %v298 = vld [vmem:[%s224] sm:$0xff]
        %v299 = vld [vmem:[%s224 + $0x8] sm:$0xff]
        %v300 = vld [vmem:[%s224 + $0x10] sm:$0xff]
        %v301 = vld [vmem:[%s224 + $0x18] sm:$0xff]
        %v302 = vld [vmem:[%s224 + $0x20] sm:$0xff]
        %v303 = vld [vmem:[%s224 + $0x28] sm:$0xff]
        %v304 = vld [vmem:[%s224 + $0x30] sm:$0xff]
        %v305 = vld [vmem:[%s224 + $0x38] sm:$0xff]
        %v306 = vld [vmem:[%s224 + $0x40] sm:$0xff]
        %v307 = vld [vmem:[%s224 + $0x48] sm:$0xff]
        %v308 = vld [vmem:[%s224 + $0x50] sm:$0xff]
        %v309 = vld [vmem:[%s224 + $0x58] sm:$0xff]
        %v310 = vld [vmem:[%s224 + $0x60] sm:$0xff]
        %v311 = vld [vmem:[%s224 + $0x68] sm:$0xff]
        %v312 = vld [vmem:[%s224 + $0x70] sm:$0xff]
        %v313 = vld [vmem:[%s224 + $0x78] sm:$0xff]
        %v314 = vld [vmem:[%s224 + $0x80] sm:$0xff]
        %v315 = vld [vmem:[%s224 + $0x88] sm:$0xff]
        %v316 = vld [vmem:[%s224 + $0x90] sm:$0xff]
        %v317 = vld [vmem:[%s224 + $0x98] sm:$0xff]
        %v318 = vld [vmem:[%s224 + $0xa0] sm:$0xff]
        %v319 = vld [vmem:[%s224 + $0xa8] sm:$0xff]
        %v320 = vld [vmem:[%s224 + $0xb0] sm:$0xff]
        %v321 = vld [vmem:[%s224 + $0xb8] sm:$0xff]
        %v322 = vld [vmem:[%s224 + $0xc0] sm:$0xff]
        %v323 = vld [vmem:[%s224 + $0xc8] sm:$0xff]
        %v324 = vld [vmem:[%s224 + $0xd0] sm:$0xff]
        %v325 = vld [vmem:[%s224 + $0xd8] sm:$0xff]
        %v326 = vld [vmem:[%s224 + $0xe0] sm:$0xff]
        %v327 = vld [vmem:[%s224 + $0xe8] sm:$0xff]
        %v328 = vld [vmem:[%s224 + $0xf0] sm:$0xff]
        %v329 = vld [vmem:[%s224 + $0xf8] sm:$0xff]
        %v330 = vld [vmem:[%s234] sm:$0xff]
        %v331 = vld [vmem:[%s234 + $0x8] sm:$0xff]
        %v332 = vld [vmem:[%s234 + $0x10] sm:$0xff]
        %v333 = vld [vmem:[%s234 + $0x18] sm:$0xff]
        %v334 = vld [vmem:[%s234 + $0x20] sm:$0xff]
        %v335 = vld [vmem:[%s234 + $0x28] sm:$0xff]
        %v336 = vld [vmem:[%s234 + $0x30] sm:$0xff]
        %v337 = vld [vmem:[%s234 + $0x38] sm:$0xff]
        %v338 = vld [vmem:[%s234 + $0x40] sm:$0xff]
        %v339 = vld [vmem:[%s234 + $0x48] sm:$0xff]
        %v340 = vld [vmem:[%s234 + $0x50] sm:$0xff]
        %v341 = vld [vmem:[%s234 + $0x58] sm:$0xff]
        %v342 = vld [vmem:[%s234 + $0x60] sm:$0xff]
        %v343 = vld [vmem:[%s234 + $0x68] sm:$0xff]
        %v344 = vld [vmem:[%s234 + $0x70] sm:$0xff]
        %v345 = vld [vmem:[%s234 + $0x78] sm:$0xff]
        %v346 = vld [vmem:[%s234 + $0x80] sm:$0xff]
        %v347 = vld [vmem:[%s234 + $0x88] sm:$0xff]
        %v348 = vld [vmem:[%s234 + $0x90] sm:$0xff]
        %v349 = vld [vmem:[%s234 + $0x98] sm:$0xff]
        %v350 = vld [vmem:[%s234 + $0xa0] sm:$0xff]
        %v351 = vld [vmem:[%s234 + $0xa8] sm:$0xff]
        %v352 = vld [vmem:[%s234 + $0xb0] sm:$0xff]
        %v353 = vld [vmem:[%s234 + $0xb8] sm:$0xff]
        %v354 = vld [vmem:[%s234 + $0xc0] sm:$0xff]
        %v355 = vld [vmem:[%s234 + $0xc8] sm:$0xff]
        %v356 = vld [vmem:[%s234 + $0xd0] sm:$0xff]
        %v357 = vld [vmem:[%s234 + $0xd8] sm:$0xff]
        %v358 = vld [vmem:[%s234 + $0xe0] sm:$0xff]
        %v359 = vld [vmem:[%s234 + $0xe8] sm:$0xff]
        %v360 = vld [vmem:[%s234 + $0xf0] sm:$0xff]
        %v361 = vld [vmem:[%s234 + $0xf8] sm:$0xff]
        %s362 = sadd.s32 %s25, %s26
        %s363 = smul.u32 %s362, 256
        %s364 = ssub.s32 256, %s363
        %p365 = scmp.ge.s32.totalorder %s364, 256
        // Predicated region
        $region41: #{esr_loss.1} parent=27 // pred_check
          %p366 = pneg %p365
        $region42: #{esr_loss.1} parent=27 // pred_check_branch
          %368 = sbr.rel (%p366) target = $region44
        $region43: #{esr_loss.1} parent=27 // pred_region
          %v369 = vsub.f32 %v298, %v330
          %v370 = vsub.f32 %v299, %v331
          %v371 = vsub.f32 %v300, %v332
          %v372 = vsub.f32 %v301, %v333
          %v373 = vsub.f32 %v302, %v334
          %v374 = vsub.f32 %v303, %v335
          %v375 = vsub.f32 %v304, %v336
          %v376 = vsub.f32 %v305, %v337
          %v377 = vsub.f32 %v306, %v338
          %v378 = vsub.f32 %v307, %v339
          %v379 = vsub.f32 %v308, %v340
          %v380 = vsub.f32 %v309, %v341
          %v381 = vsub.f32 %v310, %v342
          %v382 = vsub.f32 %v311, %v343
          %v383 = vsub.f32 %v312, %v344
          %v384 = vsub.f32 %v313, %v345
          %v385 = vsub.f32 %v314, %v346
          %v386 = vsub.f32 %v315, %v347
          %v387 = vsub.f32 %v316, %v348
          %v388 = vsub.f32 %v317, %v349
          %v389 = vsub.f32 %v318, %v350
          %v390 = vsub.f32 %v319, %v351
          %v391 = vsub.f32 %v320, %v352
          %v392 = vsub.f32 %v321, %v353
          %v393 = vsub.f32 %v322, %v354
          %v394 = vsub.f32 %v323, %v355
          %v395 = vsub.f32 %v324, %v356
          %v396 = vsub.f32 %v325, %v357
          %v397 = vsub.f32 %v326, %v358
          %v398 = vsub.f32 %v327, %v359
          %v399 = vsub.f32 %v328, %v360
          %v400 = vsub.f32 %v329, %v361
          %v401 = vld [vmem:[%s280] sm:$0xff]
          %v402 = vld [vmem:[%s280 + $0x8] sm:$0xff]
          %v403 = vld [vmem:[%s280 + $0x10] sm:$0xff]
          %v404 = vld [vmem:[%s280 + $0x18] sm:$0xff]
          %v405 = vmul.f32 %v369, %v369
          %v406 = vmul.f32 %v370, %v370
          %v407 = vmul.f32 %v371, %v371
          %v408 = vmul.f32 %v372, %v372
          %v409 = vmul.f32 %v373, %v373
          %v410 = vmul.f32 %v374, %v374
          %v411 = vmul.f32 %v375, %v375
          %v412 = vmul.f32 %v376, %v376
          %v413 = vmul.f32 %v377, %v377
          %v414 = vmul.f32 %v378, %v378
          %v415 = vmul.f32 %v379, %v379
          %v416 = vmul.f32 %v380, %v380
          %v417 = vmul.f32 %v381, %v381
          %v418 = vmul.f32 %v382, %v382
          %v419 = vmul.f32 %v383, %v383
          %v420 = vmul.f32 %v384, %v384
          %v421 = vmul.f32 %v385, %v385
          %v422 = vmul.f32 %v386, %v386
          %v423 = vmul.f32 %v387, %v387
          %v424 = vmul.f32 %v388, %v388
          %v425 = vmul.f32 %v389, %v389
          %v426 = vmul.f32 %v390, %v390
          %v427 = vmul.f32 %v391, %v391
          %v428 = vmul.f32 %v392, %v392
          %v429 = vmul.f32 %v393, %v393
          %v430 = vmul.f32 %v394, %v394
          %v431 = vmul.f32 %v395, %v395
          %v432 = vmul.f32 %v396, %v396
          %v433 = vmul.f32 %v397, %v397
          %v434 = vmul.f32 %v398, %v398
          %v435 = vmul.f32 %v399, %v399
          %v436 = vmul.f32 %v400, %v400
          %v437 = vadd.f32 %v405, %v409
          %v438 = vadd.f32 %v437, %v413
          %v439 = vadd.f32 %v438, %v417
          %v440 = vadd.f32 %v439, %v421
          %v441 = vadd.f32 %v440, %v425
          %v442 = vadd.f32 %v441, %v429
          %v443 = vadd.f32 %v442, %v433
          %v444 = vadd.f32 %v406, %v410
          %v445 = vadd.f32 %v444, %v414
          %v446 = vadd.f32 %v445, %v418
          %v447 = vadd.f32 %v446, %v422
          %v448 = vadd.f32 %v447, %v426
          %v449 = vadd.f32 %v448, %v430
          %v450 = vadd.f32 %v449, %v434
          %v451 = vadd.f32 %v407, %v411
          %v452 = vadd.f32 %v451, %v415
          %v453 = vadd.f32 %v452, %v419
          %v454 = vadd.f32 %v453, %v423
          %v455 = vadd.f32 %v454, %v427
          %v456 = vadd.f32 %v455, %v431
          %v457 = vadd.f32 %v456, %v435
          %v458 = vadd.f32 %v408, %v412
          %v459 = vadd.f32 %v458, %v416
          %v460 = vadd.f32 %v459, %v420
          %v461 = vadd.f32 %v460, %v424
          %v462 = vadd.f32 %v461, %v428
          %v463 = vadd.f32 %v462, %v432
          %v464 = vadd.f32 %v463, %v436
          %v465 = vadd.f32 %v401, %v443
          %v466 = vadd.f32 %v402, %v450
          %v467 = vadd.f32 %v403, %v457
          %v468 = vadd.f32 %v404, %v464
          %469 = vst [vmem:[%s280] sm:$0xff] %v465
          %470 = vst [vmem:[%s280 + $0x8] sm:$0xff] %v466
          %471 = vst [vmem:[%s280 + $0x10] sm:$0xff] %v467
          %472 = vst [vmem:[%s280 + $0x18] sm:$0xff] %v468
          %v473 = vld [vmem:[%s285] sm:$0xff]
          %v474 = vld [vmem:[%s285 + $0x8] sm:$0xff]
          %v475 = vld [vmem:[%s285 + $0x10] sm:$0xff]
          %v476 = vld [vmem:[%s285 + $0x18] sm:$0xff]
          %v477 = vmul.f32 %v330, %v330
          %v478 = vmul.f32 %v331, %v331
          %v479 = vmul.f32 %v332, %v332
          %v480 = vmul.f32 %v333, %v333
          %v481 = vmul.f32 %v334, %v334
          %v482 = vmul.f32 %v335, %v335
          %v483 = vmul.f32 %v336, %v336
          %v484 = vmul.f32 %v337, %v337
          %v485 = vmul.f32 %v338, %v338
          %v486 = vmul.f32 %v339, %v339
          %v487 = vmul.f32 %v340, %v340
          %v488 = vmul.f32 %v341, %v341
          %v489 = vmul.f32 %v342, %v342
          %v490 = vmul.f32 %v343, %v343
          %v491 = vmul.f32 %v344, %v344
          %v492 = vmul.f32 %v345, %v345
          %v493 = vmul.f32 %v346, %v346
          %v494 = vmul.f32 %v347, %v347
          %v495 = vmul.f32 %v348, %v348
          %v496 = vmul.f32 %v349, %v349
          %v497 = vmul.f32 %v350, %v350
          %v498 = vmul.f32 %v351, %v351
          %v499 = vmul.f32 %v352, %v352
          %v500 = vmul.f32 %v353, %v353
          %v501 = vmul.f32 %v354, %v354
          %v502 = vmul.f32 %v355, %v355
          %v503 = vmul.f32 %v356, %v356
          %v504 = vmul.f32 %v357, %v357
          %v505 = vmul.f32 %v358, %v358
          %v506 = vmul.f32 %v359, %v359
          %v507 = vmul.f32 %v360, %v360
          %v508 = vmul.f32 %v361, %v361
          %v509 = vadd.f32 %v477, %v481
          %v510 = vadd.f32 %v509, %v485
          %v511 = vadd.f32 %v510, %v489
          %v512 = vadd.f32 %v511, %v493
          %v513 = vadd.f32 %v512, %v497
          %v514 = vadd.f32 %v513, %v501
          %v515 = vadd.f32 %v514, %v505
          %v516 = vadd.f32 %v478, %v482
          %v517 = vadd.f32 %v516, %v486
          %v518 = vadd.f32 %v517, %v490
          %v519 = vadd.f32 %v518, %v494
          %v520 = vadd.f32 %v519, %v498
          %v521 = vadd.f32 %v520, %v502
          %v522 = vadd.f32 %v521, %v506
          %v523 = vadd.f32 %v479, %v483
          %v524 = vadd.f32 %v523, %v487
          %v525 = vadd.f32 %v524, %v491
          %v526 = vadd.f32 %v525, %v495
          %v527 = vadd.f32 %v526, %v499
          %v528 = vadd.f32 %v527, %v503
          %v529 = vadd.f32 %v528, %v507
          %v530 = vadd.f32 %v480, %v484
          %v531 = vadd.f32 %v530, %v488
          %v532 = vadd.f32 %v531, %v492
          %v533 = vadd.f32 %v532, %v496
          %v534 = vadd.f32 %v533, %v500
          %v535 = vadd.f32 %v534, %v504
          %v536 = vadd.f32 %v535, %v508
          %v537 = vadd.f32 %v473, %v515
          %v538 = vadd.f32 %v474, %v522
          %v539 = vadd.f32 %v475, %v529
          %v540 = vadd.f32 %v476, %v536
          %541 = vst [vmem:[%s285] sm:$0xff] %v537
          %542 = vst [vmem:[%s285 + $0x8] sm:$0xff] %v538
          %543 = vst [vmem:[%s285 + $0x10] sm:$0xff] %v539
          %544 = vst [vmem:[%s285 + $0x18] sm:$0xff] %v540
        $region44: #{esr_loss.1} parent=27 // pred_fallthru
          _
        %p545 = scmp.lt.s32.totalorder %s364, 256
        // Predicated region
        $region45: #{esr_loss.1} parent=27 // pred_check
          %p546 = pneg %p545
        $region46: #{esr_loss.1} parent=27 // pred_check_branch
          %548 = sbr.rel (%p546) target = $region48
        $region47: #{esr_loss.1} parent=27 // pred_region
          %v549 = vlaneseq
          %v550 = vshrl.u32 %v549, 7
          %v551 = vadd.s32 %v550, 8
          %v552 = vadd.s32 %v550, 16
          %v553 = vadd.s32 %v550, 24
          %v554 = vadd.s32 %v550, 32
          %v555 = vadd.s32 %v550, 40
          %v556 = vadd.s32 %v550, 48
          %v557 = vadd.s32 %v550, 56
          %v558 = vadd.s32 %v550, 64
          %v559 = vadd.s32 %v550, 72
          %v560 = vadd.s32 %v550, 80
          %v561 = vadd.s32 %v550, 88
          %v562 = vadd.s32 %v550, 96
          %v563 = vadd.s32 %v550, 104
          %v564 = vadd.s32 %v550, 112
          %v565 = vadd.s32 %v550, 120
          %v566 = vadd.s32 %v550, 128
          %v567 = vadd.s32 %v550, 136
          %v568 = vadd.s32 %v550, 144
          %v569 = vadd.s32 %v550, 152
          %v570 = vadd.s32 %v550, 160
          %v571 = vadd.s32 %v550, 168
          %v572 = vadd.s32 %v550, 176
          %v573 = vadd.s32 %v550, 184
          %v574 = vadd.s32 %v550, 192
          %v575 = vadd.s32 %v550, 200
          %v576 = vadd.s32 %v550, 208
          %v577 = vadd.s32 %v550, 216
          %v578 = vadd.s32 %v550, 224
          %v579 = vadd.s32 %v550, 232
          %v580 = vadd.s32 %v550, 240
          %v581 = vadd.s32 %v550, 248
          %v582 = vstv %s364
          %vm583 = vcmp.lt.s32.totalorder %v550, %v582
          %vm584 = vcmp.lt.s32.totalorder %v551, %v582
          %vm585 = vcmp.lt.s32.totalorder %v552, %v582
          %vm586 = vcmp.lt.s32.totalorder %v553, %v582
          %vm587 = vcmp.lt.s32.totalorder %v554, %v582
          %vm588 = vcmp.lt.s32.totalorder %v555, %v582
          %vm589 = vcmp.lt.s32.totalorder %v556, %v582
          %vm590 = vcmp.lt.s32.totalorder %v557, %v582
          %vm591 = vcmp.lt.s32.totalorder %v558, %v582
          %vm592 = vcmp.lt.s32.totalorder %v559, %v582
          %vm593 = vcmp.lt.s32.totalorder %v560, %v582
          %vm594 = vcmp.lt.s32.totalorder %v561, %v582
          %vm595 = vcmp.lt.s32.totalorder %v562, %v582
          %vm596 = vcmp.lt.s32.totalorder %v563, %v582
          %vm597 = vcmp.lt.s32.totalorder %v564, %v582
          %vm598 = vcmp.lt.s32.totalorder %v565, %v582
          %vm599 = vcmp.lt.s32.totalorder %v566, %v582
          %vm600 = vcmp.lt.s32.totalorder %v567, %v582
          %vm601 = vcmp.lt.s32.totalorder %v568, %v582
          %vm602 = vcmp.lt.s32.totalorder %v569, %v582
          %vm603 = vcmp.lt.s32.totalorder %v570, %v582
          %vm604 = vcmp.lt.s32.totalorder %v571, %v582
          %vm605 = vcmp.lt.s32.totalorder %v572, %v582
          %vm606 = vcmp.lt.s32.totalorder %v573, %v582
          %vm607 = vcmp.lt.s32.totalorder %v574, %v582
          %vm608 = vcmp.lt.s32.totalorder %v575, %v582
          %vm609 = vcmp.lt.s32.totalorder %v576, %v582
          %vm610 = vcmp.lt.s32.totalorder %v577, %v582
          %vm611 = vcmp.lt.s32.totalorder %v578, %v582
          %vm612 = vcmp.lt.s32.totalorder %v579, %v582
          %vm613 = vcmp.lt.s32.totalorder %v580, %v582
          %vm614 = vcmp.lt.s32.totalorder %v581, %v582
          %v615 = vsub.f32 %v298, %v330
          %v616 = vsub.f32 %v299, %v331
          %v617 = vsub.f32 %v300, %v332
          %v618 = vsub.f32 %v301, %v333
          %v619 = vsub.f32 %v302, %v334
          %v620 = vsub.f32 %v303, %v335
          %v621 = vsub.f32 %v304, %v336
          %v622 = vsub.f32 %v305, %v337
          %v623 = vsub.f32 %v306, %v338
          %v624 = vsub.f32 %v307, %v339
          %v625 = vsub.f32 %v308, %v340
          %v626 = vsub.f32 %v309, %v341
          %v627 = vsub.f32 %v310, %v342
          %v628 = vsub.f32 %v311, %v343
          %v629 = vsub.f32 %v312, %v344
          %v630 = vsub.f32 %v313, %v345
          %v631 = vsub.f32 %v314, %v346
          %v632 = vsub.f32 %v315, %v347
          %v633 = vsub.f32 %v316, %v348
          %v634 = vsub.f32 %v317, %v349
          %v635 = vsub.f32 %v318, %v350
          %v636 = vsub.f32 %v319, %v351
          %v637 = vsub.f32 %v320, %v352
          %v638 = vsub.f32 %v321, %v353
          %v639 = vsub.f32 %v322, %v354
          %v640 = vsub.f32 %v323, %v355
          %v641 = vsub.f32 %v324, %v356
          %v642 = vsub.f32 %v325, %v357
          %v643 = vsub.f32 %v326, %v358
          %v644 = vsub.f32 %v327, %v359
          %v645 = vsub.f32 %v328, %v360
          %v646 = vsub.f32 %v329, %v361
          %v647 = vsel %vm583, 1, 0
          %v648 = vsel %vm584, 1, 0
          %v649 = vsel %vm585, 1, 0
          %v650 = vsel %vm586, 1, 0
          %v651 = vsel %vm587, 1, 0
          %v652 = vsel %vm588, 1, 0
          %v653 = vsel %vm589, 1, 0
          %v654 = vsel %vm590, 1, 0
          %v655 = vsel %vm591, 1, 0
          %v656 = vsel %vm592, 1, 0
          %v657 = vsel %vm593, 1, 0
          %v658 = vsel %vm594, 1, 0
          %v659 = vsel %vm595, 1, 0
          %v660 = vsel %vm596, 1, 0
          %v661 = vsel %vm597, 1, 0
          %v662 = vsel %vm598, 1, 0
          %v663 = vsel %vm599, 1, 0
          %v664 = vsel %vm600, 1, 0
          %v665 = vsel %vm601, 1, 0
          %v666 = vsel %vm602, 1, 0
          %v667 = vsel %vm603, 1, 0
          %v668 = vsel %vm604, 1, 0
          %v669 = vsel %vm605, 1, 0
          %v670 = vsel %vm606, 1, 0
          %v671 = vsel %vm607, 1, 0
          %v672 = vsel %vm608, 1, 0
          %v673 = vsel %vm609, 1, 0
          %v674 = vsel %vm610, 1, 0
          %v675 = vsel %vm611, 1, 0
          %v676 = vsel %vm612, 1, 0
          %v677 = vsel %vm613, 1, 0
          %v678 = vsel %vm614, 1, 0
          %vm679 = vcmp.eq.s32.totalorder %v647, 1
          %vm680 = vcmp.eq.s32.totalorder %v648, 1
          %vm681 = vcmp.eq.s32.totalorder %v649, 1
          %vm682 = vcmp.eq.s32.totalorder %v650, 1
          %vm683 = vcmp.eq.s32.totalorder %v651, 1
          %vm684 = vcmp.eq.s32.totalorder %v652, 1
          %vm685 = vcmp.eq.s32.totalorder %v653, 1
          %vm686 = vcmp.eq.s32.totalorder %v654, 1
          %vm687 = vcmp.eq.s32.totalorder %v655, 1
          %vm688 = vcmp.eq.s32.totalorder %v656, 1
          %vm689 = vcmp.eq.s32.totalorder %v657, 1
          %vm690 = vcmp.eq.s32.totalorder %v658, 1
          %vm691 = vcmp.eq.s32.totalorder %v659, 1
          %vm692 = vcmp.eq.s32.totalorder %v660, 1
          %vm693 = vcmp.eq.s32.totalorder %v661, 1
          %vm694 = vcmp.eq.s32.totalorder %v662, 1
          %vm695 = vcmp.eq.s32.totalorder %v663, 1
          %vm696 = vcmp.eq.s32.totalorder %v664, 1
          %vm697 = vcmp.eq.s32.totalorder %v665, 1
          %vm698 = vcmp.eq.s32.totalorder %v666, 1
          %vm699 = vcmp.eq.s32.totalorder %v667, 1
          %vm700 = vcmp.eq.s32.totalorder %v668, 1
          %vm701 = vcmp.eq.s32.totalorder %v669, 1
          %vm702 = vcmp.eq.s32.totalorder %v670, 1
          %vm703 = vcmp.eq.s32.totalorder %v671, 1
          %vm704 = vcmp.eq.s32.totalorder %v672, 1
          %vm705 = vcmp.eq.s32.totalorder %v673, 1
          %vm706 = vcmp.eq.s32.totalorder %v674, 1
          %vm707 = vcmp.eq.s32.totalorder %v675, 1
          %vm708 = vcmp.eq.s32.totalorder %v676, 1
          %vm709 = vcmp.eq.s32.totalorder %v677, 1
          %vm710 = vcmp.eq.s32.totalorder %v678, 1
          %v711 = vsel %vm679, %v615, 0.0
          %v712 = vsel %vm680, %v616, 0.0
          %v713 = vsel %vm681, %v617, 0.0
          %v714 = vsel %vm682, %v618, 0.0
          %v715 = vsel %vm683, %v619, 0.0
          %v716 = vsel %vm684, %v620, 0.0
          %v717 = vsel %vm685, %v621, 0.0
          %v718 = vsel %vm686, %v622, 0.0
          %v719 = vsel %vm687, %v623, 0.0
          %v720 = vsel %vm688, %v624, 0.0
          %v721 = vsel %vm689, %v625, 0.0
          %v722 = vsel %vm690, %v626, 0.0
          %v723 = vsel %vm691, %v627, 0.0
          %v724 = vsel %vm692, %v628, 0.0
          %v725 = vsel %vm693, %v629, 0.0
          %v726 = vsel %vm694, %v630, 0.0
          %v727 = vsel %vm695, %v631, 0.0
          %v728 = vsel %vm696, %v632, 0.0
          %v729 = vsel %vm697, %v633, 0.0
          %v730 = vsel %vm698, %v634, 0.0
          %v731 = vsel %vm699, %v635, 0.0
          %v732 = vsel %vm700, %v636, 0.0
          %v733 = vsel %vm701, %v637, 0.0
          %v734 = vsel %vm702, %v638, 0.0
          %v735 = vsel %vm703, %v639, 0.0
          %v736 = vsel %vm704, %v640, 0.0
          %v737 = vsel %vm705, %v641, 0.0
          %v738 = vsel %vm706, %v642, 0.0
          %v739 = vsel %vm707, %v643, 0.0
          %v740 = vsel %vm708, %v644, 0.0
          %v741 = vsel %vm709, %v645, 0.0
          %v742 = vsel %vm710, %v646, 0.0
          %v743 = vsel %vm679, %v330, 0.0
          %v744 = vsel %vm680, %v331, 0.0
          %v745 = vsel %vm681, %v332, 0.0
          %v746 = vsel %vm682, %v333, 0.0
          %v747 = vsel %vm683, %v334, 0.0
          %v748 = vsel %vm684, %v335, 0.0
          %v749 = vsel %vm685, %v336, 0.0
          %v750 = vsel %vm686, %v337, 0.0
          %v751 = vsel %vm687, %v338, 0.0
          %v752 = vsel %vm688, %v339, 0.0
          %v753 = vsel %vm689, %v340, 0.0
          %v754 = vsel %vm690, %v341, 0.0
          %v755 = vsel %vm691, %v342, 0.0
          %v756 = vsel %vm692, %v343, 0.0
          %v757 = vsel %vm693, %v344, 0.0
          %v758 = vsel %vm694, %v345, 0.0
          %v759 = vsel %vm695, %v346, 0.0
          %v760 = vsel %vm696, %v347, 0.0
          %v761 = vsel %vm697, %v348, 0.0
          %v762 = vsel %vm698, %v349, 0.0
          %v763 = vsel %vm699, %v350, 0.0
          %v764 = vsel %vm700, %v351, 0.0
          %v765 = vsel %vm701, %v352, 0.0
          %v766 = vsel %vm702, %v353, 0.0
          %v767 = vsel %vm703, %v354, 0.0
          %v768 = vsel %vm704, %v355, 0.0
          %v769 = vsel %vm705, %v356, 0.0
          %v770 = vsel %vm706, %v357, 0.0
          %v771 = vsel %vm707, %v358, 0.0
          %v772 = vsel %vm708, %v359, 0.0
          %v773 = vsel %vm709, %v360, 0.0
          %v774 = vsel %vm710, %v361, 0.0
          %v775 = vld [vmem:[%s280] sm:$0xff]
          %v776 = vld [vmem:[%s280 + $0x8] sm:$0xff]
          %v777 = vld [vmem:[%s280 + $0x10] sm:$0xff]
          %v778 = vld [vmem:[%s280 + $0x18] sm:$0xff]
          %v779 = vmul.f32 %v711, %v711
          %v780 = vmul.f32 %v712, %v712
          %v781 = vmul.f32 %v713, %v713
          %v782 = vmul.f32 %v714, %v714
          %v783 = vmul.f32 %v715, %v715
          %v784 = vmul.f32 %v716, %v716
          %v785 = vmul.f32 %v717, %v717
          %v786 = vmul.f32 %v718, %v718
          %v787 = vmul.f32 %v719, %v719
          %v788 = vmul.f32 %v720, %v720
          %v789 = vmul.f32 %v721, %v721
          %v790 = vmul.f32 %v722, %v722
          %v791 = vmul.f32 %v723, %v723
          %v792 = vmul.f32 %v724, %v724
          %v793 = vmul.f32 %v725, %v725
          %v794 = vmul.f32 %v726, %v726
          %v795 = vmul.f32 %v727, %v727
          %v796 = vmul.f32 %v728, %v728
          %v797 = vmul.f32 %v729, %v729
          %v798 = vmul.f32 %v730, %v730
          %v799 = vmul.f32 %v731, %v731
          %v800 = vmul.f32 %v732, %v732
          %v801 = vmul.f32 %v733, %v733
          %v802 = vmul.f32 %v734, %v734
          %v803 = vmul.f32 %v735, %v735
          %v804 = vmul.f32 %v736, %v736
          %v805 = vmul.f32 %v737, %v737
          %v806 = vmul.f32 %v738, %v738
          %v807 = vmul.f32 %v739, %v739
          %v808 = vmul.f32 %v740, %v740
          %v809 = vmul.f32 %v741, %v741
          %v810 = vmul.f32 %v742, %v742
          %v811 = vadd.f32 %v779, %v783
          %v812 = vadd.f32 %v811, %v787
          %v813 = vadd.f32 %v812, %v791
          %v814 = vadd.f32 %v813, %v795
          %v815 = vadd.f32 %v814, %v799
          %v816 = vadd.f32 %v815, %v803
          %v817 = vadd.f32 %v816, %v807
          %v818 = vadd.f32 %v780, %v784
          %v819 = vadd.f32 %v818, %v788
          %v820 = vadd.f32 %v819, %v792
          %v821 = vadd.f32 %v820, %v796
          %v822 = vadd.f32 %v821, %v800
          %v823 = vadd.f32 %v822, %v804
          %v824 = vadd.f32 %v823, %v808
          %v825 = vadd.f32 %v781, %v785
          %v826 = vadd.f32 %v825, %v789
          %v827 = vadd.f32 %v826, %v793
          %v828 = vadd.f32 %v827, %v797
          %v829 = vadd.f32 %v828, %v801
          %v830 = vadd.f32 %v829, %v805
          %v831 = vadd.f32 %v830, %v809
          %v832 = vadd.f32 %v782, %v786
          %v833 = vadd.f32 %v832, %v790
          %v834 = vadd.f32 %v833, %v794
          %v835 = vadd.f32 %v834, %v798
          %v836 = vadd.f32 %v835, %v802
          %v837 = vadd.f32 %v836, %v806
          %v838 = vadd.f32 %v837, %v810
          %v839 = vadd.f32 %v775, %v817
          %v840 = vadd.f32 %v776, %v824
          %v841 = vadd.f32 %v777, %v831
          %v842 = vadd.f32 %v778, %v838
          %843 = vst [vmem:[%s280] sm:$0xff] %v839
          %844 = vst [vmem:[%s280 + $0x8] sm:$0xff] %v840
          %845 = vst [vmem:[%s280 + $0x10] sm:$0xff] %v841
          %846 = vst [vmem:[%s280 + $0x18] sm:$0xff] %v842
          %v847 = vld [vmem:[%s285] sm:$0xff]
          %v848 = vld [vmem:[%s285 + $0x8] sm:$0xff]
          %v849 = vld [vmem:[%s285 + $0x10] sm:$0xff]
          %v850 = vld [vmem:[%s285 + $0x18] sm:$0xff]
          %v851 = vmul.f32 %v743, %v743
          %v852 = vmul.f32 %v744, %v744
          %v853 = vmul.f32 %v745, %v745
          %v854 = vmul.f32 %v746, %v746
          %v855 = vmul.f32 %v747, %v747
          %v856 = vmul.f32 %v748, %v748
          %v857 = vmul.f32 %v749, %v749
          %v858 = vmul.f32 %v750, %v750
          %v859 = vmul.f32 %v751, %v751
          %v860 = vmul.f32 %v752, %v752
          %v861 = vmul.f32 %v753, %v753
          %v862 = vmul.f32 %v754, %v754
          %v863 = vmul.f32 %v755, %v755
          %v864 = vmul.f32 %v756, %v756
          %v865 = vmul.f32 %v757, %v757
          %v866 = vmul.f32 %v758, %v758
          %v867 = vmul.f32 %v759, %v759
          %v868 = vmul.f32 %v760, %v760
          %v869 = vmul.f32 %v761, %v761
          %v870 = vmul.f32 %v762, %v762
          %v871 = vmul.f32 %v763, %v763
          %v872 = vmul.f32 %v764, %v764
          %v873 = vmul.f32 %v765, %v765
          %v874 = vmul.f32 %v766, %v766
          %v875 = vmul.f32 %v767, %v767
          %v876 = vmul.f32 %v768, %v768
          %v877 = vmul.f32 %v769, %v769
          %v878 = vmul.f32 %v770, %v770
          %v879 = vmul.f32 %v771, %v771
          %v880 = vmul.f32 %v772, %v772
          %v881 = vmul.f32 %v773, %v773
          %v882 = vmul.f32 %v774, %v774
          %v883 = vadd.f32 %v851, %v855
          %v884 = vadd.f32 %v883, %v859
          %v885 = vadd.f32 %v884, %v863
          %v886 = vadd.f32 %v885, %v867
          %v887 = vadd.f32 %v886, %v871
          %v888 = vadd.f32 %v887, %v875
          %v889 = vadd.f32 %v888, %v879
          %v890 = vadd.f32 %v852, %v856
          %v891 = vadd.f32 %v890, %v860
          %v892 = vadd.f32 %v891, %v864
          %v893 = vadd.f32 %v892, %v868
          %v894 = vadd.f32 %v893, %v872
          %v895 = vadd.f32 %v894, %v876
          %v896 = vadd.f32 %v895, %v880
          %v897 = vadd.f32 %v853, %v857
          %v898 = vadd.f32 %v897, %v861
          %v899 = vadd.f32 %v898, %v865
          %v900 = vadd.f32 %v899, %v869
          %v901 = vadd.f32 %v900, %v873
          %v902 = vadd.f32 %v901, %v877
          %v903 = vadd.f32 %v902, %v881
          %v904 = vadd.f32 %v854, %v858
          %v905 = vadd.f32 %v904, %v862
          %v906 = vadd.f32 %v905, %v866
          %v907 = vadd.f32 %v906, %v870
          %v908 = vadd.f32 %v907, %v874
          %v909 = vadd.f32 %v908, %v878
          %v910 = vadd.f32 %v909, %v882
          %v911 = vadd.f32 %v847, %v889
          %v912 = vadd.f32 %v848, %v896
          %v913 = vadd.f32 %v849, %v903
          %v914 = vadd.f32 %v850, %v910
          %915 = vst [vmem:[%s285] sm:$0xff] %v911
          %916 = vst [vmem:[%s285 + $0x8] sm:$0xff] %v912
          %917 = vst [vmem:[%s285 + $0x10] sm:$0xff] %v913
          %918 = vst [vmem:[%s285 + $0x18] sm:$0xff] %v914
        $region48: #{esr_loss.1} parent=27 // pred_fallthru
          _
        %p919 = scmp.lt.s32.totalorder %s25, 1
        %s920 = scalar_select %p919, %s25, 1
        %s921 = smul.addr %s920, 4
        %s922 = smul.addr %s921, 8
        %s923 = scalar_lea.vmem %s2, %s922
        %p924 = scmp.lt.s32.totalorder %s25, 1
        %s925 = scalar_select %p924, %s25, 1
        %s926 = smul.addr %s925, 4
        %s927 = smul.addr %s926, 8
        %s928 = scalar_lea.vmem %s3, %s927
        // Predicated region
        $region49: #{esr_loss.1} parent=27 // pred_check
          %p929 = pneg %p115
        $region50: #{esr_loss.1} parent=27 // pred_check_branch
          %931 = sbr.rel (%p929) target = $region52
        $region51: #{esr_loss.1} parent=27 // pred_region
          _
        $region52: #{esr_loss.1} parent=27 // pred_fallthru
          _
        // Predicated region
        $region53: #{esr_loss.1} parent=27 // pred_check
          %p932 = pneg %p141
        $region54: #{esr_loss.1} parent=27 // pred_check_branch
          %934 = sbr.rel (%p932) target = $region56
        $region55: #{esr_loss.1} parent=27 // pred_region
          _
        $region56: #{esr_loss.1} parent=27 // pred_fallthru
          _
      $region28: #{esr_loss.1} parent=5 // pred_fallthru
        _
      %p935 = scmp.le.s32.totalorder 2, %s16
      // Predicated region
      $region57: #{esr_loss.1} parent=5 // pred_check
        %p936 = pneg %p935
      $region58: #{esr_loss.1} parent=5 // pred_check_branch
        %938 = sbr.rel (%p936) target = $region60
      $region59: #{esr_loss.1} parent=5 // pred_region
        %s939 = ssub.s32 %s16, 2
        // Predicated region
        $region61: #{esr_loss.1} parent=59 // pred_check
          %p940 = pneg %p121
        $region62: #{esr_loss.1} parent=59 // pred_check_branch
          %942 = sbr.rel (%p940) target = $region64
        $region63: #{esr_loss.1} parent=59 // pred_region
          %p943 = scmp.lt.s32.totalorder %s27, 1
          %s944 = scalar_select %p943, %s27, 1
          %s945 = smul.addr %s944, 4
          %s946 = smul.addr %s945, 8
          %s947 = scalar_lea.vmem %s2, %s946
        $region64: #{esr_loss.1} parent=59 // pred_fallthru
          _
        // Predicated region
        $region65: #{esr_loss.1} parent=59 // pred_check
          %p948 = pneg %p147
        $region66: #{esr_loss.1} parent=59 // pred_check_branch
          %950 = sbr.rel (%p948) target = $region68
        $region67: #{esr_loss.1} parent=59 // pred_region
          %p951 = scmp.lt.s32.totalorder %s27, 1
          %s952 = scalar_select %p951, %s27, 1
          %s953 = smul.addr %s952, 4
          %s954 = smul.addr %s953, 8
          %s955 = scalar_lea.vmem %s3, %s954
        $region68: #{esr_loss.1} parent=59 // pred_fallthru
          _
      $region60: #{esr_loss.1} parent=5 // pred_fallthru
        _
    $region6: #{esr_loss.1} parent=1 // loop_footer
      %s20 = sadd.s32 1, %s16
    $region7: #{esr_loss.1} parent=1 // loop_footer_branch
      %15 = sbr.rel target = $region3
    $region8: #{esr_loss.1} parent=1 // loop_exit
      _
    %956 = vsyncpa [#allocation3], 1
    %s957 = scalar_lea.sflag [#allocation3], 1
    %958 = vsyncpa %s957, 1
    %959 = vsyncpa [#allocation5], 1
    %s960 = scalar_lea.sflag [#allocation5], 1
    %961 = vsyncpa %s960, 1

</llo_original>
